<compile_context>
chip_gen: v5e
topology: v5e:2x2
jax: 0.10.0
libtpu: 0.0.40
codegen_flags: <defaults>
</compile_context>

<pallas_src>
import jax
import jax.numpy as jnp
from jax.experimental import pallas as pl
from jax.experimental.pallas import tpu as pltpu

IN_DIM = 4       # len(env.observation_space.high) for CartPole-v1
K_PAD = 8        # IN_DIM padded to a full sublane group
HIDDEN = 32
OUT_DIM = 2      # env.action_space.n for CartPole-v1
OUT_PAD = 8      # lanes actually written back (>= OUT_DIM, sublane-aligned)
LANES = 128      # TPU lane width

# Row offsets inside the packed parameter slab.  Every segment starts on a
# multiple of 8 rows so static slices in the kernel are sublane-aligned.
_W1_ROW = 0                      # (K_PAD, 128)    rows 0..7   (rows 4..7 zero)
_B1_ROW = 8                      # (1, 128)        row  8
_W2_ROW = 16                     # (128, 128)      rows 16..143
_B2_ROW = _W2_ROW + LANES        # (1, 128)        row  144
_W3_ROW = _B2_ROW + 8            # (128, 128)      rows 152..279
_B3_ROW = _W3_ROW + LANES        # (1, 128)        row  280
P_ROWS = _B3_ROW + 8             # 288 rows total  (multiple of 8)

MAX_BATCH_TILE = 4096            # rows per grid step
SPLIT_THRESHOLD = 1024           # above this, use >=2 balanced tiles (v7x 2 TCs)


def _round_up(n, m):
    return ((n + m - 1) // m) * m


def _cdiv(a, b):
    return -(-a // b)


def _mlp_kernel(x_ref, p_ref, o_ref):
    """Fused 3-layer MLP on one batch tile. p_ref is the packed param slab."""
    x = x_ref[...]                                   # (TB, K_PAD), cols 4..7 zero

    w1 = p_ref[_W1_ROW:_W1_ROW + K_PAD, :]           # (8, 128)   aligned K-tile
    b1 = p_ref[_B1_ROW:_B1_ROW + 1, :]               # (1, 128)
    w2 = p_ref[_W2_ROW:_W2_ROW + LANES, :]           # (128, 128)
    b2 = p_ref[_B2_ROW:_B2_ROW + 1, :]               # (1, 128)
    w3 = p_ref[_W3_ROW:_W3_ROW + LANES, :]           # (128, 128)
    b3 = p_ref[_B3_ROW:_B3_ROW + 1, :]               # (1, 128)

    # Padded lanes/rows of w*/b* are zero, so the extra columns stay exactly
    # zero through both ReLUs and the final layer.
    h1 = jnp.maximum(jnp.dot(x, w1, preferred_element_type=jnp.float32) + b1, 0.0)
    h2 = jnp.maximum(jnp.dot(h1, w2, preferred_element_type=jnp.float32) + b2, 0.0)
    logits = jnp.dot(h2, w3, preferred_element_type=jnp.float32) + b3  # (TB, 128)
    # Narrow writeback: only the first OUT_PAD lanes reach HBM.
    o_ref[...] = logits[:, :OUT_PAD].astype(o_ref.dtype)               # (TB, 8)


def pack_params(params):
    """Pack w1,b1,w2,b2,w3,b3 into a single lane-padded (P_ROWS, 128) slab."""
    slab = jnp.zeros((P_ROWS, LANES), jnp.float32)
    slab = slab.at[_W1_ROW:_W1_ROW + IN_DIM, 0:HIDDEN].set(params["w1"])
    slab = slab.at[_B1_ROW, 0:HIDDEN].set(params["b1"])
    slab = slab.at[_W2_ROW:_W2_ROW + HIDDEN, 0:HIDDEN].set(params["w2"])
    slab = slab.at[_B2_ROW, 0:HIDDEN].set(params["b2"])
    slab = slab.at[_W3_ROW:_W3_ROW + HIDDEN, 0:OUT_DIM].set(params["w3"])
    slab = slab.at[_B3_ROW, 0:OUT_DIM].set(params["b3"])
    return slab


def _choose_tiles(b8):
    """Pick (tile_rows, n_tiles). b8 is the batch rounded up to 8."""
    if b8 <= SPLIT_THRESHOLD:
        return b8, 1                     # single tile, single grid step
    n = max(2, _cdiv(b8, MAX_BATCH_TILE))
    if n % 2:                            # even tile count -> balanced across
        n += 1                           # v7x's 2 TensorCores
    tb = _round_up(_cdiv(b8, n), 8)
    n = _cdiv(b8, tb)                    # drop any fully-empty trailing tile
    return tb, n


def net_forward(x, param_slab):
    """x: (B, IN_DIM) float32.  param_slab: (P_ROWS, 128) from pack_params."""
    B = x.shape[0]
    b8 = _round_up(B, 8)
    # One tiny pad op: batch tail to a sublane multiple (<=7 rows) and the
    # feature dim 4 -> 8 so the first matmul reads an aligned (8, 128) K-tile.
    x = jnp.pad(x, ((0, b8 - B), (0, K_PAD - IN_DIM)))

    tb, n_tiles = _choose_tiles(b8)

    cost = pl.CostEstimate(
        flops=2 * b8 * (IN_DIM * HIDDEN + HIDDEN * HIDDEN + HIDDEN * OUT_DIM),
        transcendentals=0,
        bytes_accessed=4 * (b8 * K_PAD + P_ROWS * LANES + b8 * OUT_PAD))

    out = pl.pallas_call(
        _mlp_kernel,
        out_shape=jax.ShapeDtypeStruct((b8, OUT_PAD), jnp.float32),
        grid=(n_tiles,),
        in_specs=[
            pl.BlockSpec((tb, K_PAD), lambda i: (i, 0)),      # x: streamed
            pl.BlockSpec((P_ROWS, LANES), lambda i: (0, 0)),  # params: resident
        ],
        out_specs=pl.BlockSpec((tb, OUT_PAD), lambda i: (i, 0)),  # narrow store
        compiler_params=pltpu.CompilerParams(
            dimension_semantics=("parallel",)),
        cost_estimate=cost,
    )(x, param_slab)

    return out[:B, :OUT_DIM]


def init_params(key):
    """Deterministic init mimicking nn.Linear's uniform(-1/sqrt(fan_in), +)."""
    ks = jax.random.split(key, 6)

    def linear_init(kw, kb, fan_in, fan_out):
        bound = 1.0 / jnp.sqrt(fan_in)
        w = jax.random.uniform(kw, (fan_in, fan_out), jnp.float32, -bound, bound)
        b = jax.random.uniform(kb, (fan_out,), jnp.float32, -bound, bound)
        return w, b

    w1, b1 = linear_init(ks[0], ks[1], IN_DIM, HIDDEN)
    w2, b2 = linear_init(ks[2], ks[3], HIDDEN, HIDDEN)
    w3, b3 = linear_init(ks[4], ks[5], HIDDEN, OUT_DIM)
    return {"w1": w1, "b1": b1, "w2": w2, "b2": b2, "w3": w3, "b3": b3}


def _reference(x, p):
    h1 = jnp.maximum(x @ p["w1"] + p["b1"], 0.0)
    h2 = jnp.maximum(h1 @ p["w2"] + p["b2"], 0.0)
    return h2 @ p["w3"] + p["b3"]


if __name__ == "__main__":
    key = jax.random.PRNGKey(0)
    k_param, k_small, k_big = jax.random.split(key, 3)

    params = init_params(k_param)
    slab = pack_params(params)

    # Small RL-step-sized batch (single tile, single grid step).
    x_small = jax.random.normal(k_small, (8, IN_DIM), jnp.float32)
    out_small = jax.block_until_ready(net_forward(x_small, slab))
    ref_small = _reference(x_small, params)
    assert out_small.shape == (8, OUT_DIM)
    assert jnp.allclose(out_small, ref_small, atol=1e-5, rtol=1e-5)

    # Larger batch: 2 balanced tiles + masked ragged trailing block.
    x_big = jax.random.normal(k_big, (2500, IN_DIM), jnp.float32)
    out_big = jax.block_until_ready(net_forward(x_big, slab))
    ref_big = _reference(x_big, params)
    assert out_big.shape == (2500, OUT_DIM)
    assert jnp.allclose(out_big, ref_big, atol=1e-5, rtol=1e-5)

    print("KERNEL_OK")
</pallas_src>

<mosaic_0001>
module attributes {stable_mosaic.version = 11 : i64} {
  func.func @_mlp_kernel(%arg0: i32, %arg1: memref<8x8xf32, #tpu.memory_space<vmem>>, %arg2: memref<288x128xf32, #tpu.memory_space<vmem>>, %arg3: memref<8x8xf32, #tpu.memory_space<vmem>>) attributes {dimension_semantics = [#tpu.dimension_semantics<parallel>], iteration_bounds = array<i64: 1>, scalar_prefetch = 0 : i64, scratch_operands = 0 : i64, tpu.core_type = #tpu.core_type<tc>, window_params = [{transform_indices = @transform_0, window_bounds = array<i64: 8, 8>}, {pipeline_mode = #tpu.pipeline_mode<synchronous>, transform_indices = @transform_1, window_bounds = array<i64: 288, 128>}, {transform_indices = @transform_2, window_bounds = array<i64: 8, 8>}]} {
    %c0 = arith.constant 0 : index
    %c0_0 = arith.constant 0 : index
    %0 = vector.load %arg1[%c0, %c0_0] : memref<8x8xf32, #tpu.memory_space<vmem>>, vector<8x8xf32>
    %c0_1 = arith.constant 0 : index
    %c0_2 = arith.constant 0 : index
    %1 = vector.load %arg2[%c0_1, %c0_2] : memref<288x128xf32, #tpu.memory_space<vmem>>, vector<8x128xf32>
    %c8 = arith.constant 8 : index
    %c0_3 = arith.constant 0 : index
    %2 = vector.load %arg2[%c8, %c0_3] : memref<288x128xf32, #tpu.memory_space<vmem>>, vector<1x128xf32>
    %c16 = arith.constant 16 : index
    %c0_4 = arith.constant 0 : index
    %3 = vector.load %arg2[%c16, %c0_4] : memref<288x128xf32, #tpu.memory_space<vmem>>, vector<128x128xf32>
    %c144 = arith.constant 144 : index
    %c0_5 = arith.constant 0 : index
    %4 = vector.load %arg2[%c144, %c0_5] : memref<288x128xf32, #tpu.memory_space<vmem>>, vector<1x128xf32>
    %c152 = arith.constant 152 : index
    %c0_6 = arith.constant 0 : index
    %5 = vector.load %arg2[%c152, %c0_6] : memref<288x128xf32, #tpu.memory_space<vmem>>, vector<128x128xf32>
    %c280 = arith.constant 280 : index
    %c0_7 = arith.constant 0 : index
    %6 = vector.load %arg2[%c280, %c0_7] : memref<288x128xf32, #tpu.memory_space<vmem>>, vector<1x128xf32>
    %cst = arith.constant dense<0.000000e+00> : vector<8x128xf32>
    %7 = tpu.matmul %0, %1, %cst {dimension_numbers = #tpu.dot_dimension_numbers<[1], [0], [0], [1], [0, 0, 1, 1], [], []>} : vector<8x8xf32>, vector<8x128xf32>, vector<8x128xf32> -> vector<8x128xf32>
    %8 = vector.broadcast %2 : vector<1x128xf32> to vector<8x128xf32>
    %9 = arith.addf %7, %8 : vector<8x128xf32>
    %cst_8 = arith.constant 0.000000e+00 : f32
    %10 = vector.broadcast %cst_8 : f32 to vector<8x128xf32>
    %11 = arith.maximumf %9, %10 : vector<8x128xf32>
    %cst_9 = arith.constant dense<0.000000e+00> : vector<8x128xf32>
    %12 = tpu.matmul %11, %3, %cst_9 {dimension_numbers = #tpu.dot_dimension_numbers<[1], [0], [0], [1], [0, 0, 1, 1], [], []>} : vector<8x128xf32>, vector<128x128xf32>, vector<8x128xf32> -> vector<8x128xf32>
    %13 = vector.broadcast %4 : vector<1x128xf32> to vector<8x128xf32>
    %14 = arith.addf %12, %13 : vector<8x128xf32>
    %cst_10 = arith.constant 0.000000e+00 : f32
    %15 = vector.broadcast %cst_10 : f32 to vector<8x128xf32>
    %16 = arith.maximumf %14, %15 : vector<8x128xf32>
    %cst_11 = arith.constant dense<0.000000e+00> : vector<8x128xf32>
    %17 = tpu.matmul %16, %5, %cst_11 {dimension_numbers = #tpu.dot_dimension_numbers<[1], [0], [0], [1], [0, 0, 1, 1], [], []>} : vector<8x128xf32>, vector<128x128xf32>, vector<8x128xf32> -> vector<8x128xf32>
    %18 = vector.broadcast %6 : vector<1x128xf32> to vector<8x128xf32>
    %19 = arith.addf %17, %18 : vector<8x128xf32>
    %20 = vector.extract_strided_slice %19 {offsets = [0, 0], sizes = [8, 8], strides = [1, 1]} : vector<8x128xf32> to vector<8x8xf32>
    %c0_12 = arith.constant 0 : index
    %c0_13 = arith.constant 0 : index
    %21 = vector.load %arg3[%c0_12, %c0_13] : memref<8x8xf32, #tpu.memory_space<vmem>>, vector<8x8xf32>
    tpu.vector_store %arg3[%c0_12, %c0_13], %20 {strides = array<i32>} : memref<8x8xf32, #tpu.memory_space<vmem>>, vector<8x8xf32>,
    return
  }
  func.func @transform_0(%arg0: i32) -> (i32, i32) {
    %c0_i32 = arith.constant 0 : i32
    %c0_i32_0 = arith.constant 0 : i32
    return %arg0, %c0_i32 : i32, i32
  }
  func.func @transform_1(%arg0: i32) -> (i32, i32) {
    %c0_i32 = arith.constant 0 : i32
    %c0_i32_0 = arith.constant 0 : i32
    %c0_i32_1 = arith.constant 0 : i32
    return %c0_i32, %c0_i32_0 : i32, i32
  }
  func.func @transform_2(%arg0: i32) -> (i32, i32) {
    %c0_i32 = arith.constant 0 : i32
    %c0_i32_0 = arith.constant 0 : i32
    return %arg0, %c0_i32 : i32, i32
  }
}

</mosaic_0001>

<llo_original>
// kernel: tpu_custom_call.1
$region0: #{tpu_custom_call.1}
  #allocation0 [shape = 'u32[]', space=smem, size = 0x4, offset = 0x4, fixed_abs, tag = 'smem constant byte address 0x4 - core index']
  #allocation1 [shape = 'u32[72,128]{1,0:T(1,128)}', space=vmem, size = 0x9000, scoped, tag = 'internal scratch']
  %s0 = inlined_call_operand.hbm [shape: f32[8,8], index: 0, kind: input, shape index: {}]
  %s1 = inlined_call_operand.hbm [shape: f32[288,128], index: 1, kind: input, shape index: {}]
  %s2 = inlined_call_operand.hbm [shape: f32[8,8], index: 2, kind: output, shape index: {}]
  %s3 = sld [smem:[#allocation0]]
  $region26: #{tpu_custom_call.1} parent=0
    _
  %s5 = ssub.s32 1, %s3
  %s6 = scalar_select 0, %s5, %s3
  $region1: #{tpu_custom_call.1} parent=0
    #allocation2 [shape = 'u8[4096]{0}', space=vmem, size = 0x1000, scoped, tag = 'input window, operand 0, single buffered']
    #allocation3 [shape = 's32[1]{0}', space=sflag, size = 0x4, scoped, tag = 'scoped memory for tpu_custom_call.1']
    #allocation4 [shape = 's32[1]{0}', space=sflag, size = 0x4, scoped, tag = 'scoped memory for tpu_custom_call.1']
    #allocation5 [shape = 'u8[147456]{0}', space=vmem, size = 0x24000, scoped, tag = 'input window, operand 1, single buffered']
    #allocation6 [shape = 's32[1]{0}', space=sflag, size = 0x4, scoped, tag = 'scoped memory for tpu_custom_call.1']
    #allocation7 [shape = 'u8[4096]{0}', space=vmem, size = 0x1000, scoped, tag = 'output window, operand 0, single buffered']
    %7 = vsyncpa [#allocation3], 0
    %8 = vsyncpa [#allocation6], 0
    %9 = vsyncpa [#allocation4], 0
    // Predicated region
    $region2: #{tpu_custom_call.1} parent=1 // pred_check
      _
    $region3: #{tpu_custom_call.1} parent=1 // pred_check_branch
      %11 = sbr.rel (0) target = $region5
    $region4: #{tpu_custom_call.1} parent=1 // pred_region
      %13 = vsyncadd [#allocation3], 0
      %s15 = sshll.u32 %s0, 4
      %s16 = int_to_ptr.hbm [resolvable:$true] %s15
      %s17 = sshll.u32 [#allocation2], 4
      %s18 = int_to_ptr.vmem [resolvable:$true] %s17
      %20 = dma.hbm_to_vmem [thread:$0]  %s16, 128, %s18, [#allocation3]
    $region5: #{tpu_custom_call.1} parent=1 // pred_fallthru
      _
    // Predicated region
    $region6: #{tpu_custom_call.1} parent=1 // pred_check
      _
    $region7: #{tpu_custom_call.1} parent=1 // pred_check_branch
      %22 = sbr.rel (0) target = $region9
    $region8: #{tpu_custom_call.1} parent=1 // pred_region
      %24 = vsyncadd [#allocation6], 0
      %s25 = sshll.u32 %s1, 4
      %s26 = int_to_ptr.hbm [resolvable:$true] %s25
      %s27 = sshll.u32 [#allocation5], 4
      %s28 = int_to_ptr.vmem [resolvable:$true] %s27
      %33 = dma.hbm_to_vmem [thread:$0]  %s26, 4608, %s28, [#allocation6], 128, 128, 8
    $region9: #{tpu_custom_call.1} parent=1 // pred_fallthru
      _
    // Predicated region
    $region10: #{tpu_custom_call.1} parent=1 // pred_check
      _
    $region11: #{tpu_custom_call.1} parent=1 // pred_check_branch
      %35 = sbr.rel (0) target = $region13
    $region12: #{tpu_custom_call.1} parent=1 // pred_region
      %37 = dma.done [#allocation3], 128
    $region13: #{tpu_custom_call.1} parent=1 // pred_fallthru
      _
    // Predicated region
    $region14: #{tpu_custom_call.1} parent=1 // pred_check
      _
    $region15: #{tpu_custom_call.1} parent=1 // pred_check_branch
      %39 = sbr.rel (0) target = $region17
    $region16: #{tpu_custom_call.1} parent=1 // pred_region
      %41 = dma.done [#allocation6], 4608
    $region17: #{tpu_custom_call.1} parent=1 // pred_fallthru
      _
    %v42 = vld [vmem:[#allocation2] sm:$0xff]
    %v43 = vld [vmem:[#allocation5] sm:$0xff]
    %v44 = vld [vmem:[#allocation5 + $0x8] sm:$0x1]
    %v45 = vld [vmem:[#allocation5 + $0x10] sm:$0xff]
    %v46 = vld [vmem:[#allocation5 + $0x18] sm:$0xff]
    %v47 = vld [vmem:[#allocation5 + $0x20] sm:$0xff]
    %v48 = vld [vmem:[#allocation5 + $0x28] sm:$0xff]
    %v49 = vld [vmem:[#allocation5 + $0x30] sm:$0xff]
    %v50 = vld [vmem:[#allocation5 + $0x38] sm:$0xff]
    %v51 = vld [vmem:[#allocation5 + $0x40] sm:$0xff]
    %v52 = vld [vmem:[#allocation5 + $0x48] sm:$0xff]
    %v53 = vld [vmem:[#allocation5 + $0x50] sm:$0xff]
    %v54 = vld [vmem:[#allocation5 + $0x58] sm:$0xff]
    %v55 = vld [vmem:[#allocation5 + $0x60] sm:$0xff]
    %v56 = vld [vmem:[#allocation5 + $0x68] sm:$0xff]
    %v57 = vld [vmem:[#allocation5 + $0x70] sm:$0xff]
    %v58 = vld [vmem:[#allocation5 + $0x78] sm:$0xff]
    %v59 = vld [vmem:[#allocation5 + $0x80] sm:$0xff]
    %v60 = vld [vmem:[#allocation5 + $0x88] sm:$0xff]
    %v61 = vld [vmem:[#allocation5 + $0x90] sm:$0x1]
    %v62 = vld [vmem:[#allocation5 + $0x98] sm:$0xff]
    %v63 = vld [vmem:[#allocation5 + $0xa0] sm:$0xff]
    %v64 = vld [vmem:[#allocation5 + $0xa8] sm:$0xff]
    %v65 = vld [vmem:[#allocation5 + $0xb0] sm:$0xff]
    %v66 = vld [vmem:[#allocation5 + $0xb8] sm:$0xff]
    %v67 = vld [vmem:[#allocation5 + $0xc0] sm:$0xff]
    %v68 = vld [vmem:[#allocation5 + $0xc8] sm:$0xff]
    %v69 = vld [vmem:[#allocation5 + $0xd0] sm:$0xff]
    %v70 = vld [vmem:[#allocation5 + $0xd8] sm:$0xff]
    %v71 = vld [vmem:[#allocation5 + $0xe0] sm:$0xff]
    %v72 = vld [vmem:[#allocation5 + $0xe8] sm:$0xff]
    %v73 = vld [vmem:[#allocation5 + $0xf0] sm:$0xff]
    %v74 = vld [vmem:[#allocation5 + $0xf8] sm:$0xff]
    %v75 = vld [vmem:[#allocation5 + $0x100] sm:$0xff]
    %v76 = vld [vmem:[#allocation5 + $0x108] sm:$0xff]
    %v77 = vld [vmem:[#allocation5 + $0x110] sm:$0xff]
    %v78 = vld [vmem:[#allocation5 + $0x118] sm:$0x1]
    %v79 = vperm.slane %v44, 0
    %vm80 = vcmask 64512
    %v82 = vsel %vm80, %v42, 0
    %84 = vmatpush.msra.mxu0 0.0
    %85 = vmatpush.msra.mxu0 0.0
    %86 = vmatpush.msra.mxu0 0.0
    %87 = vmatpush.msra.mxu0 0.0
    %88 = vmatpush.msra.mxu0 0.0
    %89 = vmatpush.msra.mxu0 0.0
    %90 = vmatpush.msra.mxu0 0.0
    %91 = vmatpush.msra.mxu0 0.0
    %92 = vmatpush.msra.mxu0 0.0
    %93 = vmatpush.msra.mxu0 0.0
    %94 = vmatpush.msra.mxu0 0.0
    %95 = vmatpush.msra.mxu0 0.0
    %96 = vmatpush.msra.mxu0 0.0
    %97 = vmatpush.msra.mxu0 0.0
    %98 = vmatpush.msra.mxu0 0.0
    %99 = vmatpush.msra.mxu0 %v43
    %100 = vmatmul.f32.gmra.mxu0 %v82
    %v101 = vpop.f32.mrf.mxu0
    %v102 = vadd.f32 %v79, %v101
    %103 = vdwg.mxu0
    %v104 = vmax.f32 %v102, 0.0
    %v105 = vperm.slane %v61, 0
    %106 = vmatpush.msra.mxu0 %v60
    %107 = vmatpush.msra.mxu0 %v59
    %108 = vmatpush.msra.mxu0 %v58
    %109 = vmatpush.msra.mxu0 %v57
    %110 = vmatpush.msra.mxu0 %v56
    %111 = vmatpush.msra.mxu0 %v55
    %112 = vmatpush.msra.mxu0 %v54
    %113 = vmatpush.msra.mxu0 %v53
    %114 = vmatpush.msra.mxu0 %v52
    %115 = vmatpush.msra.mxu0 %v51
    %116 = vmatpush.msra.mxu0 %v50
    %117 = vmatpush.msra.mxu0 %v49
    %118 = vmatpush.msra.mxu0 %v48
    %119 = vmatpush.msra.mxu0 %v47
    %120 = vmatpush.msra.mxu0 %v46
    %121 = vmatpush.msra.mxu0 %v45
    %122 = vmatmul.f32.gmra.mxu0 %v104
    %v123 = vpop.f32.mrf.mxu0
    %v124 = vadd.f32 %v105, %v123
    %125 = vdwg.mxu0
    %v126 = vmax.f32 %v124, 0.0
    %v127 = vperm.slane %v78, 0
    %128 = vmatpush.msra.mxu0 %v77
    %129 = vmatpush.msra.mxu0 %v76
    %130 = vmatpush.msra.mxu0 %v75
    %131 = vmatpush.msra.mxu0 %v74
    %132 = vmatpush.msra.mxu0 %v73
    %133 = vmatpush.msra.mxu0 %v72
    %134 = vmatpush.msra.mxu0 %v71
    %135 = vmatpush.msra.mxu0 %v70
    %136 = vmatpush.msra.mxu0 %v69
    %137 = vmatpush.msra.mxu0 %v68
    %138 = vmatpush.msra.mxu0 %v67
    %139 = vmatpush.msra.mxu0 %v66
    %140 = vmatpush.msra.mxu0 %v65
    %141 = vmatpush.msra.mxu0 %v64
    %142 = vmatpush.msra.mxu0 %v63
    %143 = vmatpush.msra.mxu0 %v62
    %144 = vmatmul.f32.gmra.mxu0 %v126
    %v145 = vpop.f32.mrf.mxu0
    %v146 = vadd.f32 %v127, %v145
    %147 = vdwg.mxu0
    %148 = vst.msk [vmem:[#allocation7] sm:$0xff] %vm80, %v146
    // Predicated region
    $region18: #{tpu_custom_call.1} parent=1 // pred_check
      _
    $region19: #{tpu_custom_call.1} parent=1 // pred_check_branch
      %150 = sbr.rel (0) target = $region21
    $region20: #{tpu_custom_call.1} parent=1 // pred_region
      %152 = vsyncadd [#allocation4], 0
      %s154 = sshll.u32 [#allocation7], 4
      %s155 = int_to_ptr.vmem [resolvable:$true] %s154
      %s156 = sshll.u32 %s2, 4
      %s157 = int_to_ptr.hbm [resolvable:$true] %s156
      %159 = dma.vmem_to_hbm [thread:$0]  %s155, 128, %s157, [#allocation4]
    $region21: #{tpu_custom_call.1} parent=1 // pred_fallthru
      _
    // Predicated region
    $region22: #{tpu_custom_call.1} parent=1 // pred_check
      _
    $region23: #{tpu_custom_call.1} parent=1 // pred_check_branch
      %161 = sbr.rel (0) target = $region25
    $region24: #{tpu_custom_call.1} parent=1 // pred_region
      %163 = dma.done [#allocation4], 128
    $region25: #{tpu_custom_call.1} parent=1 // pred_fallthru
      _
    %164 = vsyncpa [#allocation3], 1
    %165 = vsyncpa [#allocation6], 1
    %166 = vsyncpa [#allocation4], 1

</llo_original>
